<compile_context>
chip_gen: v5e
topology: v5e:2x2
jax: 0.10.0
libtpu: 0.0.40
codegen_flags: <defaults>
</compile_context>

<pallas_src>
import functools

import jax
import jax.numpy as jnp
from jax.experimental import pallas as pl
from jax.experimental.pallas import tpu as pltpu


# ---------------------------------------------------------------------------
# Hardware-aware sizing helpers
# ---------------------------------------------------------------------------

def _vmem_budget_bytes():
    """~75% of physical VMEM (128 MiB on v5e/v6e, 64 MiB on v7x); conservative
    48 MiB default when the query is unavailable."""
    cap = None
    try:
        info = pltpu.get_tpu_info()
        cap = getattr(info, "vmem_capacity_bytes", None)
    except Exception:
        cap = None
    if not cap:
        cap = 64 * 1024 * 1024
    return max(int(cap) * 3 // 4, 32 * 1024 * 1024)


def _num_tensorcores():
    """TensorCores per device: 2 on megacore (v4/v5p) and v7x, else 1."""
    try:
        dev = jax.devices()[0]
        n = getattr(dev, "num_cores", None)
        if n:
            return int(n)
        kind = dev.device_kind.lower()
        if any(tag in kind for tag in ("v4", "v5p", "v7")):
            return 2
    except Exception:
        pass
    return 1


def _pick_fused_b_tile(B, per_batch_vmem, fixed_vmem, budget, n_cores):
    """Largest divisor of B whose slab fits the VMEM budget.  On 2-TensorCore
    chips keep >= 2 grid steps (so both cores get work).  Returns 0 when even
    a single batch slab does not fit (=> two-pass fallback)."""
    best = 0
    for cand in range(1, B + 1):
        if B % cand:
            continue
        if cand * per_batch_vmem + fixed_vmem > budget:
            continue
        if n_cores > 1 and B >= n_cores and (B // cand) < n_cores:
            continue
        best = cand
    return best


def _pick_fallback_c_tile(C, HW, ebytes, budget):
    """Channel tile for the two-pass fallback (full H*W per block, so pooling
    needs no accumulation and no lane masking)."""
    per_c = HW * (4 * ebytes + 2 * 4)   # dbl-buffered in+out + f32 pooling temp
    if C % 8 != 0:
        # TODO(synk): channel padding for C not a multiple of 8 combined with a
        # huge H*W; such shapes keep the full channel dim per block.
        return C
    best = 8
    cand = 8
    while cand <= C:
        if C % cand == 0 and cand * per_c <= budget:
            best = cand
        cand += 8
    return best


# ---------------------------------------------------------------------------
# Fused single-pass kernel: pool -> shared MLP + sigmoid -> scale
# (one HBM read + one HBM write of x per batch tile)
# ---------------------------------------------------------------------------

def _fused_cam_kernel(x_ref, w1_ref, b1_ref, w2_ref, b2_ref, o_ref, *, inv_hw):
    # x_ref: (b_tile, C, HW).  Pool / MLP / sigmoid math in f32.
    xf = x_ref[...].astype(jnp.float32)
    mx = jnp.max(xf, axis=-1)                        # (b_tile, C)
    av = jnp.sum(xf, axis=-1) * inv_hw               # (b_tile, C)

    w1 = w1_ref[...]                                 # (Cr, C)   f32
    b1 = b1_ref[...]                                 # (1, Cr)
    w2 = w2_ref[...]                                 # (C, Cr)
    b2 = b2_ref[...]                                 # (1, C, 1)

    def mlp(v):                                      # (b_tile, C) -> (b_tile, C, 1)
        # Tiny contractions as broadcast-multiply + lane reductions (sub-tile
        # matmul shapes); runs on VPU/XLU and hides completely under the DMA.
        h = jnp.maximum(jnp.sum(v[:, None, :] * w1, axis=-1) + b1, 0.0)   # (b_tile, Cr)
        return jnp.sum(h[:, None, :] * w2, axis=-1, keepdims=True) + b2   # (b_tile, C, 1)

    z = mlp(mx) + mlp(av)                            # (b_tile, C, 1)
    gate = 1.0 / (1.0 + jnp.exp(-z))                 # sigmoid, f32
    # Final broadcast multiply in the input dtype (gate is in [0, 1]).
    o_ref[...] = x_ref[...] * gate.astype(o_ref.dtype)


def _cam_fused(x3, w1, b1, w2, b2, *, b_tile, inv_hw, vmem_limit):
    B, C, HW = x3.shape
    n_b = B // b_tile
    kernel = functools.partial(_fused_cam_kernel, inv_hw=inv_hw)
    return pl.pallas_call(
        kernel,
        out_shape=jax.ShapeDtypeStruct((B, C, HW), x3.dtype),
        grid_spec=pltpu.PrefetchScalarGridSpec(
            num_scalar_prefetch=0,
            grid=(n_b,),
            in_specs=[
                pl.BlockSpec((b_tile, C, HW), lambda b: (b, 0, 0)),
                pl.BlockSpec(w1.shape, lambda b: (0, 0)),      # replicated, tiny
                pl.BlockSpec(b1.shape, lambda b: (0, 0)),
                pl.BlockSpec(w2.shape, lambda b: (0, 0)),
                pl.BlockSpec(b2.shape, lambda b: (0, 0, 0)),
            ],
            out_specs=pl.BlockSpec((b_tile, C, HW), lambda b: (b, 0, 0)),
        ),
        compiler_params=pltpu.CompilerParams(
            dimension_semantics=("parallel",),
            vmem_limit_bytes=int(vmem_limit)),
    )(x3, w1, b1, w2, b2)


# ---------------------------------------------------------------------------
# Two-pass fallback (channel-tiled, full H*W per block)
# ---------------------------------------------------------------------------

def _pool_kernel(x_ref, max_ref, sum_ref):
    xf = x_ref[...].astype(jnp.float32)              # (1, c_tile, HW)
    max_ref[...] = jnp.max(xf, axis=-1, keepdims=True)
    sum_ref[...] = jnp.sum(xf, axis=-1, keepdims=True)


def _scale_kernel(x_ref, gate_ref, o_ref):
    o_ref[...] = x_ref[...] * gate_ref[...]          # broadcast over H*W lanes


def _cam_two_pass(x3, w1, b1, w2, b2, *, c_tile, inv_hw, vmem_limit):
    B, C, HW = x3.shape
    n_c = C // c_tile

    pooled_max, pooled_sum = pl.pallas_call(
        _pool_kernel,
        out_shape=(jax.ShapeDtypeStruct((B, C, 1), jnp.float32),
                   jax.ShapeDtypeStruct((B, C, 1), jnp.float32)),
        grid_spec=pltpu.PrefetchScalarGridSpec(
            num_scalar_prefetch=0,
            grid=(B, n_c),
            in_specs=[pl.BlockSpec((1, c_tile, HW), lambda b, c: (b, c, 0))],
            out_specs=(pl.BlockSpec((1, c_tile, 1), lambda b, c: (b, c, 0)),
                       pl.BlockSpec((1, c_tile, 1), lambda b, c: (b, c, 0))),
        ),
        compiler_params=pltpu.CompilerParams(
            dimension_semantics=("parallel", "parallel"),
            vmem_limit_bytes=int(vmem_limit)),
    )(x3)

    # Tiny shared MLP + sigmoid, once, in XLA (f32).
    mx = pooled_max[:, :, 0]
    av = pooled_sum[:, :, 0] * inv_hw

    def mlp(v):
        h = jnp.maximum(v @ w1.T + b1, 0.0)
        return h @ w2.T + b2

    gate = jax.nn.sigmoid(mlp(mx) + mlp(av))          # (B, C) f32
    gate = gate[:, :, None].astype(x3.dtype)          # multiply in input dtype

    return pl.pallas_call(
        _scale_kernel,
        out_shape=jax.ShapeDtypeStruct((B, C, HW), x3.dtype),
        grid_spec=pltpu.PrefetchScalarGridSpec(
            num_scalar_prefetch=0,
            grid=(B, n_c),
            in_specs=[pl.BlockSpec((1, c_tile, HW), lambda b, c: (b, c, 0)),
                      pl.BlockSpec((1, c_tile, 1), lambda b, c: (b, c, 0))],
            out_specs=pl.BlockSpec((1, c_tile, HW), lambda b, c: (b, c, 0)),
        ),
        compiler_params=pltpu.CompilerParams(
            dimension_semantics=("parallel", "parallel"),
            vmem_limit_bytes=int(vmem_limit)),
    )(x3, gate)


# ---------------------------------------------------------------------------
# Public wrapper
# ---------------------------------------------------------------------------

def cam_forward(x_nchw, w1, b1, w2, b2, *, force_two_pass=False):
    """CAM forward. x_nchw: (B, C, H, W), any float dtype; returns same shape
    and dtype.  w1: (C//r, C), b1: (C//r,), w2: (C, C//r), b2: (C,)."""
    B, C, H, W = x_nchw.shape
    HW = H * W
    dtype = x_nchw.dtype
    ebytes = jnp.dtype(dtype).itemsize
    inv_hw = 1.0 / float(HW)
    Cr = w1.shape[0]

    budget = _vmem_budget_bytes()
    n_cores = _num_tensorcores()

    w1f = w1.astype(jnp.float32)
    b1f = b1.astype(jnp.float32)
    w2f = w2.astype(jnp.float32)
    b2f = b2.astype(jnp.float32)

    x3 = x_nchw.reshape(B, C, HW)

    # Fused-path VMEM per batch row: double-buffered in + out slabs, the f32
    # pooling temp, and the tiny MLP intermediates; plus fixed weight blocks.
    per_batch = 4 * C * HW * ebytes + 2 * C * HW * 4 + 4 * C * Cr * 4
    fixed = 2 * 4 * int(w1f.size + b1f.size + w2f.size + b2f.size) + (1 << 20)

    b_tile = 0 if force_two_pass else _pick_fused_b_tile(
        B, per_batch, fixed, budget, n_cores)

    if b_tile:
        out = _cam_fused(x3, w1f, b1f.reshape(1, Cr), w2f, b2f.reshape(1, C, 1),
                         b_tile=b_tile, inv_hw=inv_hw, vmem_limit=budget)
    else:
        c_tile = _pick_fallback_c_tile(C, HW, ebytes, budget)
        out = _cam_two_pass(x3, w1f, b1f, w2f, b2f,
                            c_tile=c_tile, inv_hw=inv_hw, vmem_limit=budget)

    return out.reshape(B, C, H, W)


def cam_reference(x_nchw, w1, b1, w2, b2):
    """Pure-JAX reference matching the PyTorch forward (f32)."""
    B, C, H, W = x_nchw.shape
    xf = x_nchw.astype(jnp.float32)
    mx = jnp.max(xf.reshape(B, C, -1), axis=-1)
    av = jnp.mean(xf.reshape(B, C, -1), axis=-1)

    def mlp(v):
        h = jnp.maximum(v @ w1.T + b1, 0.0)
        return h @ w2.T + b2

    gate = jax.nn.sigmoid(mlp(mx) + mlp(av))
    return xf * gate[:, :, None, None]


if __name__ == "__main__":
    B, C, H, W = 2, 4, 16, 16
    r = 2
    Cr = C // r

    key = jax.random.PRNGKey(0)
    kx, k1, k2, k3, k4 = jax.random.split(key, 5)

    x = jax.random.normal(kx, (B, C, H, W), dtype=jnp.float32)

    # nn.Linear weights: (out_features, in_features)
    bound1 = 1.0 / (C ** 0.5)
    bound2 = 1.0 / (Cr ** 0.5)
    w1 = jax.random.uniform(k1, (Cr, C), minval=-bound1, maxval=bound1, dtype=jnp.float32)
    b1 = jax.random.uniform(k2, (Cr,), minval=-bound1, maxval=bound1, dtype=jnp.float32)
    w2 = jax.random.uniform(k3, (C, Cr), minval=-bound2, maxval=bound2, dtype=jnp.float32)
    b2 = jax.random.uniform(k4, (C,), minval=-bound2, maxval=bound2, dtype=jnp.float32)

    fwd_fused = jax.jit(cam_forward)
    fwd_two_pass = jax.jit(functools.partial(cam_forward, force_two_pass=True))

    ref = cam_reference(x, w1, b1, w2, b2)

    # Fused single-pass path, f32 I/O.
    out = jax.block_until_ready(fwd_fused(x, w1, b1, w2, b2))
    assert out.shape == (B, C, H, W) and out.dtype == jnp.float32
    assert jnp.allclose(out, ref, atol=1e-4, rtol=1e-4), "fused f32 mismatch vs reference"

    # Fused path, bf16 I/O (halves HBM bytes; internal gate math stays f32).
    x_bf16 = x.astype(jnp.bfloat16)
    out_bf16 = jax.block_until_ready(fwd_fused(x_bf16, w1, b1, w2, b2))
    ref_bf16 = cam_reference(x_bf16.astype(jnp.float32), w1, b1, w2, b2)
    assert out_bf16.dtype == jnp.bfloat16
    assert jnp.allclose(out_bf16.astype(jnp.float32), ref_bf16, atol=2e-2, rtol=2e-2), \
        "fused bf16 mismatch vs reference"

    # Two-pass fallback path (exercised explicitly so both code paths are tested).
    out_tp = jax.block_until_ready(fwd_two_pass(x, w1, b1, w2, b2))
    assert jnp.allclose(out_tp, ref, atol=1e-4, rtol=1e-4), "two-pass f32 mismatch vs reference"

    print("KERNEL_OK")
</pallas_src>

<mosaic_0001>
module attributes {stable_mosaic.version = 11 : i64} {
  func.func @_fused_cam_kernel(%arg0: i32, %arg1: memref<2x4x256xf32, #tpu.memory_space<vmem>>, %arg2: memref<2x4xf32, #tpu.memory_space<vmem>>, %arg3: memref<1x2xf32, #tpu.memory_space<vmem>>, %arg4: memref<4x2xf32, #tpu.memory_space<vmem>>, %arg5: memref<1x4x1xf32, #tpu.memory_space<vmem>>, %arg6: memref<2x4x256xf32, #tpu.memory_space<vmem>>) attributes {dimension_semantics = [#tpu.dimension_semantics<parallel>], iteration_bounds = array<i64: 1>, scalar_prefetch = 0 : i64, scratch_operands = 0 : i64, tpu.core_type = #tpu.core_type<tc>, window_params = [{transform_indices = @transform_0, window_bounds = array<i64: 2, 4, 256>}, {pipeline_mode = #tpu.pipeline_mode<synchronous>, transform_indices = @transform_1, window_bounds = array<i64: 2, 4>}, {pipeline_mode = #tpu.pipeline_mode<synchronous>, transform_indices = @transform_2, window_bounds = array<i64: 1, 2>}, {pipeline_mode = #tpu.pipeline_mode<synchronous>, transform_indices = @transform_3, window_bounds = array<i64: 4, 2>}, {pipeline_mode = #tpu.pipeline_mode<synchronous>, transform_indices = @transform_4, window_bounds = array<i64: 1, 4, 1>}, {transform_indices = @transform_5, window_bounds = array<i64: 2, 4, 256>}]} {
    %c0 = arith.constant 0 : index
    %c0_0 = arith.constant 0 : index
    %c0_1 = arith.constant 0 : index
    %0 = vector.load %arg1[%c0, %c0_0, %c0_1] : memref<2x4x256xf32, #tpu.memory_space<vmem>>, vector<2x4x256xf32>
    %cst = arith.constant dense<0xFF800000> : vector<2x4xf32>
    %1 = vector.multi_reduction <maximumf>, %0, %cst [2] : vector<2x4x256xf32> to vector<2x4xf32>
    %cst_2 = arith.constant dense<0.000000e+00> : vector<2x4xf32>
    %2 = vector.multi_reduction <add>, %0, %cst_2 [2] : vector<2x4x256xf32> to vector<2x4xf32>
    %cst_3 = arith.constant 3.906250e-03 : f32
    %3 = vector.broadcast %cst_3 : f32 to vector<2x4xf32>
    %4 = arith.mulf %2, %3 : vector<2x4xf32>
    %c0_4 = arith.constant 0 : index
    %c0_5 = arith.constant 0 : index
    %5 = vector.load %arg2[%c0_4, %c0_5] : memref<2x4xf32, #tpu.memory_space<vmem>>, vector<2x4xf32>
    %c0_6 = arith.constant 0 : index
    %c0_7 = arith.constant 0 : index
    %6 = vector.load %arg3[%c0_6, %c0_7] : memref<1x2xf32, #tpu.memory_space<vmem>>, vector<1x2xf32>
    %c0_8 = arith.constant 0 : index
    %c0_9 = arith.constant 0 : index
    %7 = vector.load %arg4[%c0_8, %c0_9] : memref<4x2xf32, #tpu.memory_space<vmem>>, vector<4x2xf32>
    %c0_10 = arith.constant 0 : index
    %c0_11 = arith.constant 0 : index
    %c0_12 = arith.constant 0 : index
    %8 = vector.load %arg5[%c0_10, %c0_11, %c0_12] : memref<1x4x1xf32, #tpu.memory_space<vmem>>, vector<1x4x1xf32>
    %9 = vector.shape_cast %1 : vector<2x4xf32> to vector<2x1x4xf32>
    %10 = vector.shape_cast %5 : vector<2x4xf32> to vector<1x2x4xf32>
    %11 = vector.broadcast %9 : vector<2x1x4xf32> to vector<2x2x4xf32>
    %12 = vector.broadcast %10 : vector<1x2x4xf32> to vector<2x2x4xf32>
    %13 = arith.mulf %11, %12 : vector<2x2x4xf32>
    %cst_13 = arith.constant dense<0.000000e+00> : vector<2x2xf32>
    %14 = vector.multi_reduction <add>, %13, %cst_13 [2] : vector<2x2x4xf32> to vector<2x2xf32>
    %15 = vector.broadcast %6 : vector<1x2xf32> to vector<2x2xf32>
    %16 = arith.addf %14, %15 : vector<2x2xf32>
    %cst_14 = arith.constant 0.000000e+00 : f32
    %17 = vector.broadcast %cst_14 : f32 to vector<2x2xf32>
    %18 = arith.maximumf %16, %17 : vector<2x2xf32>
    %19 = vector.shape_cast %18 : vector<2x2xf32> to vector<2x1x2xf32>
    %20 = vector.shape_cast %7 : vector<4x2xf32> to vector<1x4x2xf32>
    %21 = vector.broadcast %19 : vector<2x1x2xf32> to vector<2x4x2xf32>
    %22 = vector.broadcast %20 : vector<1x4x2xf32> to vector<2x4x2xf32>
    %23 = arith.mulf %21, %22 : vector<2x4x2xf32>
    %cst_15 = arith.constant dense<0.000000e+00> : vector<2x4xf32>
    %24 = vector.multi_reduction <add>, %23, %cst_15 [2] : vector<2x4x2xf32> to vector<2x4xf32>
    %25 = vector.shape_cast %24 : vector<2x4xf32> to vector<2x4x1xf32>
    %26 = vector.broadcast %8 : vector<1x4x1xf32> to vector<2x4x1xf32>
    %27 = arith.addf %25, %26 : vector<2x4x1xf32>
    %28 = vector.shape_cast %4 : vector<2x4xf32> to vector<2x1x4xf32>
    %29 = vector.shape_cast %5 : vector<2x4xf32> to vector<1x2x4xf32>
    %30 = vector.broadcast %28 : vector<2x1x4xf32> to vector<2x2x4xf32>
    %31 = vector.broadcast %29 : vector<1x2x4xf32> to vector<2x2x4xf32>
    %32 = arith.mulf %30, %31 : vector<2x2x4xf32>
    %cst_16 = arith.constant dense<0.000000e+00> : vector<2x2xf32>
    %33 = vector.multi_reduction <add>, %32, %cst_16 [2] : vector<2x2x4xf32> to vector<2x2xf32>
    %34 = vector.broadcast %6 : vector<1x2xf32> to vector<2x2xf32>
    %35 = arith.addf %33, %34 : vector<2x2xf32>
    %cst_17 = arith.constant 0.000000e+00 : f32
    %36 = vector.broadcast %cst_17 : f32 to vector<2x2xf32>
    %37 = arith.maximumf %35, %36 : vector<2x2xf32>
    %38 = vector.shape_cast %37 : vector<2x2xf32> to vector<2x1x2xf32>
    %39 = vector.shape_cast %7 : vector<4x2xf32> to vector<1x4x2xf32>
    %40 = vector.broadcast %38 : vector<2x1x2xf32> to vector<2x4x2xf32>
    %41 = vector.broadcast %39 : vector<1x4x2xf32> to vector<2x4x2xf32>
    %42 = arith.mulf %40, %41 : vector<2x4x2xf32>
    %cst_18 = arith.constant dense<0.000000e+00> : vector<2x4xf32>
    %43 = vector.multi_reduction <add>, %42, %cst_18 [2] : vector<2x4x2xf32> to vector<2x4xf32>
    %44 = vector.shape_cast %43 : vector<2x4xf32> to vector<2x4x1xf32>
    %45 = vector.broadcast %8 : vector<1x4x1xf32> to vector<2x4x1xf32>
    %46 = arith.addf %44, %45 : vector<2x4x1xf32>
    %47 = arith.addf %27, %46 : vector<2x4x1xf32>
    %cst_19 = arith.constant 0.000000e+00 : f32
    %48 = vector.broadcast %cst_19 : f32 to vector<2x4x1xf32>
    %49 = arith.subf %48, %47 : vector<2x4x1xf32>
    %50 = math.exp %49 : vector<2x4x1xf32>
    %cst_20 = arith.constant 1.000000e+00 : f32
    %51 = vector.broadcast %cst_20 : f32 to vector<2x4x1xf32>
    %52 = arith.addf %51, %50 : vector<2x4x1xf32>
    %cst_21 = arith.constant 1.000000e+00 : f32
    %53 = vector.broadcast %cst_21 : f32 to vector<2x4x1xf32>
    %54 = arith.divf %53, %52 : vector<2x4x1xf32>
    %c0_22 = arith.constant 0 : index
    %c0_23 = arith.constant 0 : index
    %c0_24 = arith.constant 0 : index
    %55 = vector.load %arg1[%c0_22, %c0_23, %c0_24] : memref<2x4x256xf32, #tpu.memory_space<vmem>>, vector<2x4x256xf32>
    %56 = vector.broadcast %54 : vector<2x4x1xf32> to vector<2x4x256xf32>
    %57 = arith.mulf %55, %56 : vector<2x4x256xf32>
    %c0_25 = arith.constant 0 : index
    %c0_26 = arith.constant 0 : index
    %c0_27 = arith.constant 0 : index
    %58 = vector.load %arg6[%c0_25, %c0_26, %c0_27] : memref<2x4x256xf32, #tpu.memory_space<vmem>>, vector<2x4x256xf32>
    tpu.vector_store %arg6[%c0_25, %c0_26, %c0_27], %57 {strides = array<i32>} : memref<2x4x256xf32, #tpu.memory_space<vmem>>, vector<2x4x256xf32>,
    return
  }
  func.func @transform_0(%arg0: i32) -> (i32, i32, i32) {
    %c0_i32 = arith.constant 0 : i32
    %c0_i32_0 = arith.constant 0 : i32
    %c0_i32_1 = arith.constant 0 : i32
    return %arg0, %c0_i32, %c0_i32_0 : i32, i32, i32
  }
  func.func @transform_1(%arg0: i32) -> (i32, i32) {
    %c0_i32 = arith.constant 0 : i32
    %c0_i32_0 = arith.constant 0 : i32
    %c0_i32_1 = arith.constant 0 : i32
    return %c0_i32, %c0_i32_0 : i32, i32
  }
  func.func @transform_2(%arg0: i32) -> (i32, i32) {
    %c0_i32 = arith.constant 0 : i32
    %c0_i32_0 = arith.constant 0 : i32
    %c0_i32_1 = arith.constant 0 : i32
    return %c0_i32, %c0_i32_0 : i32, i32
  }
  func.func @transform_3(%arg0: i32) -> (i32, i32) {
    %c0_i32 = arith.constant 0 : i32
    %c0_i32_0 = arith.constant 0 : i32
    %c0_i32_1 = arith.constant 0 : i32
    return %c0_i32, %c0_i32_0 : i32, i32
  }
  func.func @transform_4(%arg0: i32) -> (i32, i32, i32) {
    %c0_i32 = arith.constant 0 : i32
    %c0_i32_0 = arith.constant 0 : i32
    %c0_i32_1 = arith.constant 0 : i32
    %c0_i32_2 = arith.constant 0 : i32
    return %c0_i32, %c0_i32_0, %c0_i32_1 : i32, i32, i32
  }
  func.func @transform_5(%arg0: i32) -> (i32, i32, i32) {
    %c0_i32 = arith.constant 0 : i32
    %c0_i32_0 = arith.constant 0 : i32
    %c0_i32_1 = arith.constant 0 : i32
    return %arg0, %c0_i32, %c0_i32_0 : i32, i32, i32
  }
}

</mosaic_0001>

<llo_original>
// kernel: cam_forward.1
$region0: #{cam_forward.1}
  #allocation0 [shape = 'u32[]', space=smem, size = 0x4, offset = 0x4, fixed_abs, tag = 'smem constant byte address 0x4 - core index']
  #allocation1 [shape = 'u32[72,128]{1,0:T(1,128)}', space=vmem, size = 0x9000, scoped, tag = 'internal scratch']
  %s0 = inlined_call_operand.vmem [shape: f32[2,4,256], index: 0, kind: input, shape index: {}]
  %s1 = inlined_call_operand.vmem [shape: f32[2,4], index: 1, kind: input, shape index: {}]
  %s2 = inlined_call_operand.vmem [shape: f32[1,2], index: 2, kind: input, shape index: {}]
  %s3 = inlined_call_operand.vmem [shape: f32[4,2], index: 3, kind: input, shape index: {}]
  %s4 = inlined_call_operand.vmem [shape: f32[1,4,1], index: 4, kind: input, shape index: {}]
  %s5 = inlined_call_operand.vmem [shape: f32[2,4,256], index: 5, kind: output, shape index: {}]
  %s6 = sld [smem:[#allocation0]]
  $region30: #{cam_forward.1} parent=0
    _
  %s8 = ssub.s32 1, %s6
  %s9 = scalar_select 0, %s8, %s6
  // Predicated region
  $region2: #{cam_forward.1} parent=0 // pred_check
    _
  $region3: #{cam_forward.1} parent=0 // pred_check_branch
    %11 = sbr.rel (0) target = $region5
  $region4: #{cam_forward.1} parent=0 // pred_region
    _
  $region5: #{cam_forward.1} parent=0 // pred_fallthru
    _
  // Predicated region
  $region6: #{cam_forward.1} parent=0 // pred_check
    _
  $region7: #{cam_forward.1} parent=0 // pred_check_branch
    %13 = sbr.rel (0) target = $region9
  $region8: #{cam_forward.1} parent=0 // pred_region
    _
  $region9: #{cam_forward.1} parent=0 // pred_fallthru
    _
  // Predicated region
  $region10: #{cam_forward.1} parent=0 // pred_check
    _
  $region11: #{cam_forward.1} parent=0 // pred_check_branch
    %15 = sbr.rel (0) target = $region13
  $region12: #{cam_forward.1} parent=0 // pred_region
    _
  $region13: #{cam_forward.1} parent=0 // pred_fallthru
    _
  // Predicated region
  $region14: #{cam_forward.1} parent=0 // pred_check
    _
  $region15: #{cam_forward.1} parent=0 // pred_check_branch
    %17 = sbr.rel (0) target = $region17
  $region16: #{cam_forward.1} parent=0 // pred_region
    _
  $region17: #{cam_forward.1} parent=0 // pred_fallthru
    _
  // Predicated region
  $region18: #{cam_forward.1} parent=0 // pred_check
    _
  $region19: #{cam_forward.1} parent=0 // pred_check_branch
    %19 = sbr.rel (0) target = $region21
  $region20: #{cam_forward.1} parent=0 // pred_region
    _
  $region21: #{cam_forward.1} parent=0 // pred_fallthru
    _
  %v20 = vld [vmem:[%s0] sm:$0xff]
  %v21 = vld [vmem:[%s0 + $0x8] sm:$0xff]
  %24 = vst [vmem:[#allocation1] ss:$2 sm:$0xff] %v20
  %v25 = vld.sshfl [vmem:[#allocation1] sm:$0xff pattern:$0x75316420]
  %v26 = vld.sshfl [vmem:[#allocation1 + $0x8] sm:$0xff pattern:$0x75316420]
  %s27 = scalar_lea.vmem [#allocation1], 16
  %28 = vst [vmem:[%s27] ss:$2 sm:$0xff] %v21
  %v29 = vld.sshfl [vmem:[#allocation1 + $0x10] sm:$0xff pattern:$0x75316420]
  %v30 = vld.sshfl [vmem:[#allocation1 + $0x18] sm:$0xff pattern:$0x75316420]
  %vm35 = vcmask 1043456
  %v36 = vsel %vm35, %v25, -inf
  %v37 = vsel %vm35, %v26, -inf
  %v38 = vmax.f32 %v36, %v37
  %39 = vmax.xlane.f32.xlu0 %v38
  %v40 = vpop.xlane.xlu0 %39
  %v41 = vsel %vm35, %v29, -inf
  %v42 = vsel %vm35, %v30, -inf
  %v43 = vmax.f32 %v41, %v42
  %44 = vmax.xlane.f32.xlu0 %v43
  %v45 = vpop.xlane.xlu0 %44
  %46 = vst [vmem:[#allocation1] ss:$2 sm:$0xff] %v20
  %v47 = vld.sshfl [vmem:[#allocation1] sm:$0xff pattern:$0x75316420]
  %v48 = vld.sshfl [vmem:[#allocation1 + $0x8] sm:$0xff pattern:$0x75316420]
  %s49 = scalar_lea.vmem [#allocation1], 16
  %50 = vst [vmem:[%s49] ss:$2 sm:$0xff] %v21
  %v51 = vld.sshfl [vmem:[#allocation1 + $0x10] sm:$0xff pattern:$0x75316420]
  %v52 = vld.sshfl [vmem:[#allocation1 + $0x18] sm:$0xff pattern:$0x75316420]
  %v57 = vsel %vm35, %v47, 0.0
  %v58 = vsel %vm35, %v48, 0.0
  %v59 = vadd.f32 %v57, %v58
  %60 = vadd.xlane.f32.xlu0 %v59
  %v61 = vpop.xlane.xlu0 %60
  %v62 = vsel %vm35, %v51, 0.0
  %v63 = vsel %vm35, %v52, 0.0
  %v64 = vadd.f32 %v62, %v63
  %65 = vadd.xlane.f32.xlu0 %v64
  %v66 = vpop.xlane.xlu0 %65
  %v67 = vmul.f32 %v61, 0.00390625
  %v68 = vmul.f32 %v66, 0.00390625
  %v69 = vld [vmem:[%s1] sm:$0x3]
  %v70 = vld [vmem:[%s2] sm:$0x1]
  %v71 = vld [vmem:[%s3] sm:$0xf]
  %v72 = vld [vmem:[%s4] sm:$0xf]
  %v74 = vperm.slane %v69, 0
  %v75 = vlaneseq
  %v76 = vshrl.u32 %v75, 7
  %78 = vset.pattern.permute.xlu0 %v76
  %79 = vperm.xlu0 %78, %v74
  %v80 = vpop.permute.xlu0 %79
  %v81 = vperm.slane %v69, 1
  %v82 = vlaneseq
  %v83 = vshrl.u32 %v82, 7
  %85 = vset.pattern.permute.xlu0 %v83
  %86 = vperm.xlu0 %85, %v81
  %v87 = vpop.permute.xlu0 %86
  %v90 = vmul.f32 %v40, %v80
  %v91 = vmul.f32 %v40, %v87
  %v92 = vmul.f32 %v45, %v80
  %v93 = vmul.f32 %v45, %v87
  %98 = vset.pattern.permute.xlu0 0
  %99 = vperm.xlu0 %98, %v90
  %v100 = vpop.permute.xlu0 %99
  %101 = vset.pattern.permute.xlu0 0
  %102 = vperm.xlu0 %101, %v91
  %v103 = vpop.permute.xlu0 %102
  %104 = vset.pattern.permute.xlu0 0
  %105 = vperm.xlu0 %104, %v92
  %v106 = vpop.permute.xlu0 %105
  %107 = vset.pattern.permute.xlu0 0
  %108 = vperm.xlu0 %107, %v93
  %v109 = vpop.permute.xlu0 %108
  %v110 = vlaneseq
  %v111 = vand.u32 %v110, 127
  %v112 = vperm.slane %v100, %v111
  %v113 = vperm.slane %v103, %v111
  %v114 = vperm.slane %v106, %v111
  %v115 = vperm.slane %v109, %v111
  %vm116 = vcmask 1041409
  %v117 = vsel %vm116, %v113, %v112
  %v118 = vsel %vm116, %v115, %v114
  %vm121 = vcmask 25600
  %v122 = vsel %vm121, %v117, 0.0
  %123 = vadd.xlane.f32.xlu0 %v122
  %v124 = vpop.xlane.xlu0 %123
  %v125 = vsel %vm121, %v118, 0.0
  %126 = vadd.xlane.f32.xlu0 %v125
  %v127 = vpop.xlane.xlu0 %126
  %v129 = vperm.slane %v70, 0
  %v130 = vlaneseq
  %v131 = vshrl.u32 %v130, 7
  %133 = vset.pattern.permute.xlu0 %v131
  %134 = vperm.xlu0 %133, %v129
  %v135 = vpop.permute.xlu0 %134
  %v137 = vadd.f32 %v124, %v135
  %v138 = vadd.f32 %v127, %v135
  %v139 = vmax.f32 %v137, 0.0
  %v140 = vmax.f32 %v138, 0.0
  %v142 = vperm.slane %v71, 0
  %v143 = vlaneseq
  %v144 = vshrl.u32 %v143, 7
  %146 = vset.pattern.permute.xlu0 %v144
  %147 = vperm.xlu0 %146, %v142
  %v148 = vpop.permute.xlu0 %147
  %v149 = vperm.slane %v71, 1
  %v150 = vlaneseq
  %v151 = vshrl.u32 %v150, 7
  %153 = vset.pattern.permute.xlu0 %v151
  %154 = vperm.xlu0 %153, %v149
  %v155 = vpop.permute.xlu0 %154
  %v156 = vperm.slane %v71, 2
  %v157 = vlaneseq
  %v158 = vshrl.u32 %v157, 7
  %160 = vset.pattern.permute.xlu0 %v158
  %161 = vperm.xlu0 %160, %v156
  %v162 = vpop.permute.xlu0 %161
  %v163 = vperm.slane %v71, 3
  %v164 = vlaneseq
  %v165 = vshrl.u32 %v164, 7
  %167 = vset.pattern.permute.xlu0 %v165
  %168 = vperm.xlu0 %167, %v163
  %v169 = vpop.permute.xlu0 %168
  %v174 = vmul.f32 %v139, %v148
  %v175 = vmul.f32 %v139, %v155
  %v176 = vmul.f32 %v139, %v162
  %v177 = vmul.f32 %v139, %v169
  %v178 = vmul.f32 %v140, %v148
  %v179 = vmul.f32 %v140, %v155
  %v180 = vmul.f32 %v140, %v162
  %v181 = vmul.f32 %v140, %v169
  %190 = vset.pattern.permute.xlu0 0
  %191 = vperm.xlu0 %190, %v174
  %v192 = vpop.permute.xlu0 %191
  %193 = vset.pattern.permute.xlu0 0
  %194 = vperm.xlu0 %193, %v175
  %v195 = vpop.permute.xlu0 %194
  %196 = vset.pattern.permute.xlu0 0
  %197 = vperm.xlu0 %196, %v176
  %v198 = vpop.permute.xlu0 %197
  %199 = vset.pattern.permute.xlu0 0
  %200 = vperm.xlu0 %199, %v177
  %v201 = vpop.permute.xlu0 %200
  %202 = vset.pattern.permute.xlu0 0
  %203 = vperm.xlu0 %202, %v178
  %v204 = vpop.permute.xlu0 %203
  %205 = vset.pattern.permute.xlu0 0
  %206 = vperm.xlu0 %205, %v179
  %v207 = vpop.permute.xlu0 %206
  %208 = vset.pattern.permute.xlu0 0
  %209 = vperm.xlu0 %208, %v180
  %v210 = vpop.permute.xlu0 %209
  %211 = vset.pattern.permute.xlu0 0
  %212 = vperm.xlu0 %211, %v181
  %v213 = vpop.permute.xlu0 %212
  %v214 = vperm.slane %v192, %v111
  %v215 = vperm.slane %v195, %v111
  %v216 = vperm.slane %v198, %v111
  %v217 = vperm.slane %v201, %v111
  %v218 = vperm.slane %v204, %v111
  %v219 = vperm.slane %v207, %v111
  %v220 = vperm.slane %v210, %v111
  %v221 = vperm.slane %v213, %v111
  %v222 = vsel %vm116, %v215, %v214
  %vm223 = vcmask 1042434
  %v224 = vsel %vm223, %v216, %v222
  %vm225 = vcmask 1043459
  %v226 = vsel %vm225, %v217, %v224
  %v227 = vsel %vm116, %v219, %v218
  %v228 = vsel %vm223, %v220, %v227
  %v229 = vsel %vm225, %v221, %v228
  %vm232 = vcmask 11264
  %v233 = vsel %vm232, %v226, 0.0
  %234 = vadd.xlane.f32.xlu0 %v233
  %v235 = vpop.xlane.xlu0 %234
  %v236 = vsel %vm232, %v229, 0.0
  %237 = vadd.xlane.f32.xlu0 %v236
  %v238 = vpop.xlane.xlu0 %237
  %v239 = vadd.f32 %v235, %v72
  %v240 = vadd.f32 %v238, %v72
  %v241 = vmul.f32 %v67, %v80
  %v242 = vmul.f32 %v67, %v87
  %v243 = vmul.f32 %v68, %v80
  %v244 = vmul.f32 %v68, %v87
  %249 = vset.pattern.permute.xlu0 0
  %250 = vperm.xlu0 %249, %v241
  %v251 = vpop.permute.xlu0 %250
  %252 = vset.pattern.permute.xlu0 0
  %253 = vperm.xlu0 %252, %v242
  %v254 = vpop.permute.xlu0 %253
  %255 = vset.pattern.permute.xlu0 0
  %256 = vperm.xlu0 %255, %v243
  %v257 = vpop.permute.xlu0 %256
  %258 = vset.pattern.permute.xlu0 0
  %259 = vperm.xlu0 %258, %v244
  %v260 = vpop.permute.xlu0 %259
  %v261 = vperm.slane %v251, %v111
  %v262 = vperm.slane %v254, %v111
  %v263 = vperm.slane %v257, %v111
  %v264 = vperm.slane %v260, %v111
  %v265 = vsel %vm116, %v262, %v261
  %v266 = vsel %vm116, %v264, %v263
  %v269 = vsel %vm121, %v265, 0.0
  %270 = vadd.xlane.f32.xlu0 %v269
  %v271 = vpop.xlane.xlu0 %270
  %v272 = vsel %vm121, %v266, 0.0
  %273 = vadd.xlane.f32.xlu0 %v272
  %v274 = vpop.xlane.xlu0 %273
  %v275 = vadd.f32 %v271, %v135
  %v276 = vadd.f32 %v274, %v135
  %v277 = vmax.f32 %v275, 0.0
  %v278 = vmax.f32 %v276, 0.0
  %v279 = vmul.f32 %v277, %v148
  %v280 = vmul.f32 %v277, %v155
  %v281 = vmul.f32 %v277, %v162
  %v282 = vmul.f32 %v277, %v169
  %v283 = vmul.f32 %v278, %v148
  %v284 = vmul.f32 %v278, %v155
  %v285 = vmul.f32 %v278, %v162
  %v286 = vmul.f32 %v278, %v169
  %295 = vset.pattern.permute.xlu0 0
  %296 = vperm.xlu0 %295, %v279
  %v297 = vpop.permute.xlu0 %296
  %298 = vset.pattern.permute.xlu0 0
  %299 = vperm.xlu0 %298, %v280
  %v300 = vpop.permute.xlu0 %299
  %301 = vset.pattern.permute.xlu0 0
  %302 = vperm.xlu0 %301, %v281
  %v303 = vpop.permute.xlu0 %302
  %304 = vset.pattern.permute.xlu0 0
  %305 = vperm.xlu0 %304, %v282
  %v306 = vpop.permute.xlu0 %305
  %307 = vset.pattern.permute.xlu0 0
  %308 = vperm.xlu0 %307, %v283
  %v309 = vpop.permute.xlu0 %308
  %310 = vset.pattern.permute.xlu0 0
  %311 = vperm.xlu0 %310, %v284
  %v312 = vpop.permute.xlu0 %311
  %313 = vset.pattern.permute.xlu0 0
  %314 = vperm.xlu0 %313, %v285
  %v315 = vpop.permute.xlu0 %314
  %316 = vset.pattern.permute.xlu0 0
  %317 = vperm.xlu0 %316, %v286
  %v318 = vpop.permute.xlu0 %317
  %v319 = vperm.slane %v297, %v111
  %v320 = vperm.slane %v300, %v111
  %v321 = vperm.slane %v303, %v111
  %v322 = vperm.slane %v306, %v111
  %v323 = vperm.slane %v309, %v111
  %v324 = vperm.slane %v312, %v111
  %v325 = vperm.slane %v315, %v111
  %v326 = vperm.slane %v318, %v111
  %v327 = vsel %vm116, %v320, %v319
  %v328 = vsel %vm223, %v321, %v327
  %v329 = vsel %vm225, %v322, %v328
  %v330 = vsel %vm116, %v324, %v323
  %v331 = vsel %vm223, %v325, %v330
  %v332 = vsel %vm225, %v326, %v331
  %v335 = vsel %vm232, %v329, 0.0
  %336 = vadd.xlane.f32.xlu0 %v335
  %v337 = vpop.xlane.xlu0 %336
  %v338 = vsel %vm232, %v332, 0.0
  %339 = vadd.xlane.f32.xlu0 %v338
  %v340 = vpop.xlane.xlu0 %339
  %v341 = vadd.f32 %v337, %v72
  %v342 = vadd.f32 %v340, %v72
  %v343 = vadd.f32 %v239, %v341
  %v344 = vadd.f32 %v240, %v342
  %v345 = vsub.f32 0.0, %v343
  %v346 = vsub.f32 0.0, %v344
  %v347 = vmul.f32 %v345, 1.442695
  %v348 = vpow.pop %v347
  %v349 = vmul.f32 %v346, 1.442695
  %v350 = vpow.pop %v349
  %v351 = vadd.f32 %v348, 1.0
  %v352 = vadd.f32 %v350, 1.0
  %v353 = vrcp.pop %v351
  %v354 = vmul.f32 %v351, %v353
  %v355 = vsub.f32 1.0, %v354
  %v356 = vmul.f32 %v353, %v355
  %v357 = vadd.f32 %v353, %v356
  %vm358 = vweird.f32 %v351
  %vm359 = vweird.f32 %v353
  %vm360 = vmor %vm358, %vm359
  %v361 = vsel %vm360, %v353, %v357
  %v362 = vand.u32 2147483647, %v351
  %vm363 = vcmp.eq.f32.partialorder %v362, 8.507059e+37
  %v364 = vand.u32 %v351, 2147483648
  %v365 = vor.u32 1.1754944e-38, %v364
  %v366 = vsel %vm363, %v365, %v361
  %v367 = vmul.f32 1.0, %v366
  %v368 = vrcp.pop %v352
  %v369 = vmul.f32 %v352, %v368
  %v370 = vsub.f32 1.0, %v369
  %v371 = vmul.f32 %v368, %v370
  %v372 = vadd.f32 %v368, %v371
  %vm373 = vweird.f32 %v352
  %vm374 = vweird.f32 %v368
  %vm375 = vmor %vm373, %vm374
  %v376 = vsel %vm375, %v368, %v372
  %v377 = vand.u32 2147483647, %v352
  %vm378 = vcmp.eq.f32.partialorder %v377, 8.507059e+37
  %v379 = vand.u32 %v352, 2147483648
  %v380 = vor.u32 1.1754944e-38, %v379
  %v381 = vsel %vm378, %v380, %v376
  %v382 = vmul.f32 1.0, %v381
  %384 = vset.pattern.permute.xlu0 0
  %385 = vperm.xlu0 %384, %v367
  %v386 = vpop.permute.xlu0 %385
  %388 = vset.pattern.permute.xlu0 0
  %389 = vperm.xlu0 %388, %v382
  %v390 = vpop.permute.xlu0 %389
  %v392 = vunpack.c.l.s4 839922192
  %v393 = vunpack.c.0.s8 %v392
  %v394 = vperm.slane %v386, %v393
  %v396 = vunpack.c.l.s4 839922192
  %v397 = vunpack.c.0.s8 %v396
  %v398 = vperm.slane %v390, %v397
  %v401 = vmul.f32 %v20, %v394
  %v402 = vmul.f32 %v21, %v398
  %403 = vst [vmem:[%s5] sm:$0xff] %v401
  %404 = vst [vmem:[%s5 + $0x8] sm:$0xff] %v402
  // Predicated region
  $region22: #{cam_forward.1} parent=0 // pred_check
    _
  $region23: #{cam_forward.1} parent=0 // pred_check_branch
    %406 = sbr.rel (0) target = $region25
  $region24: #{cam_forward.1} parent=0 // pred_region
    _
  $region25: #{cam_forward.1} parent=0 // pred_fallthru
    _
  // Predicated region
  $region26: #{cam_forward.1} parent=0 // pred_check
    _
  $region27: #{cam_forward.1} parent=0 // pred_check_branch
    %408 = sbr.rel (0) target = $region29
  $region28: #{cam_forward.1} parent=0 // pred_region
    _
  $region29: #{cam_forward.1} parent=0 // pred_fallthru
    _

</llo_original>
